<compile_context>
chip_gen: v6e
topology: v6e:2x2x1
jax: 0.10.0
libtpu: 0.0.40
codegen_flags: <defaults>
</compile_context>

<pallas_src>
import functools
import math

import jax
import jax.numpy as jnp
from jax.experimental import pallas as pl
from jax.experimental.pallas import tpu as pltpu


_VMEM_LIMIT_BYTES = 64 * 1024 * 1024


def _row_tile(m, target=1024):
    # Full array if small (block == full dim is always legal); otherwise a
    # sublane-aligned tile (target % 8 == 0). Partial last blocks are masked.
    return m if m <= target else target


def _compiler_params(n_axes=1):
    return pltpu.CompilerParams(
        dimension_semantics=("parallel",) * n_axes,
        vmem_limit_bytes=_VMEM_LIMIT_BYTES)


# ---------------------------------------------------------------------------
# Kernels
# ---------------------------------------------------------------------------

def _ln_linear_kernel(x_ref, g_ref, b_ref, wt_ref, bias_ref, o_ref):
    # Fused LayerNorm(x) @ W^T + bias   (wt_ref already holds W^T: (d_in, d_out))
    x = x_ref[...].astype(jnp.float32)
    mean = jnp.mean(x, axis=-1, keepdims=True)
    var = jnp.mean(jnp.square(x - mean), axis=-1, keepdims=True)
    xn = (x - mean) * jax.lax.rsqrt(var + 1e-5)
    xn = xn * g_ref[...].astype(jnp.float32) + b_ref[...].astype(jnp.float32)
    acc = jnp.dot(xn, wt_ref[...].astype(jnp.float32),
                  preferred_element_type=jnp.float32)
    o_ref[...] = (acc + bias_ref[...].astype(jnp.float32)).astype(o_ref.dtype)


def _linear_kernel(x_ref, wt_ref, bias_ref, o_ref):
    acc = jnp.dot(x_ref[...].astype(jnp.float32), wt_ref[...].astype(jnp.float32),
                  preferred_element_type=jnp.float32)
    o_ref[...] = (acc + bias_ref[...].astype(jnp.float32)).astype(o_ref.dtype)


def _fc_residual_kernel(x_ref, wt_ref, bias_ref, r_ref, o_ref):
    acc = jnp.dot(x_ref[...].astype(jnp.float32), wt_ref[...].astype(jnp.float32),
                  preferred_element_type=jnp.float32)
    o_ref[...] = (acc + bias_ref[...].astype(jnp.float32)
                  + r_ref[...].astype(jnp.float32)).astype(o_ref.dtype)


def _attn_compute(q_ref, k_ref, v_ref, temperature):
    # One batch per grid step, all heads at once.
    q = q_ref[0].astype(jnp.float32)  # (H, Lq, Dk)
    k = k_ref[0].astype(jnp.float32)  # (H, Lk, Dk)
    v = v_ref[0].astype(jnp.float32)  # (H, Lk, Dv)
    # Batched q @ k^T without an explicit transpose: contract last dims, batch on H.
    s = jax.lax.dot_general(q, k, (((2,), (2,)), ((0,), (0,))),
                            preferred_element_type=jnp.float32)
    s = s * (1.0 / temperature)
    s = s - jnp.max(s, axis=-1, keepdims=True)
    e = jnp.exp(s)
    p = e * pl.reciprocal(jnp.sum(e, axis=-1, keepdims=True), approx=True)
    o = jax.lax.dot_general(p, v, (((2,), (1,)), ((0,), (0,))),
                            preferred_element_type=jnp.float32)
    return p, o


def _attn_kernel(q_ref, k_ref, v_ref, o_ref, a_ref, *, temperature):
    p, o = _attn_compute(q_ref, k_ref, v_ref, temperature)
    a_ref[0] = p.astype(a_ref.dtype)
    o_ref[0] = o.astype(o_ref.dtype)


def _attn_kernel_no_probs(q_ref, k_ref, v_ref, o_ref, *, temperature):
    _, o = _attn_compute(q_ref, k_ref, v_ref, temperature)
    o_ref[0] = o.astype(o_ref.dtype)


# ---------------------------------------------------------------------------
# Pallas wrappers
# ---------------------------------------------------------------------------

def ln_linear_pl(x2d, gamma, beta, wt, bias):
    M, d_in = x2d.shape
    d_out = wt.shape[1]
    tm = _row_tile(M)
    return pl.pallas_call(
        _ln_linear_kernel,
        out_shape=jax.ShapeDtypeStruct((M, d_out), x2d.dtype),
        grid=(pl.cdiv(M, tm),),
        in_specs=[pl.BlockSpec((tm, d_in), lambda i: (i, 0)),
                  pl.BlockSpec((1, d_in), lambda i: (0, 0)),
                  pl.BlockSpec((1, d_in), lambda i: (0, 0)),
                  pl.BlockSpec((d_in, d_out), lambda i: (0, 0)),
                  pl.BlockSpec((1, d_out), lambda i: (0, 0))],
        out_specs=pl.BlockSpec((tm, d_out), lambda i: (i, 0)),
        compiler_params=_compiler_params(1),
    )(x2d, gamma.reshape(1, d_in), beta.reshape(1, d_in), wt, bias.reshape(1, d_out))


def linear_pl(x2d, wt, bias):
    M, d_in = x2d.shape
    d_out = wt.shape[1]
    tm = _row_tile(M)
    return pl.pallas_call(
        _linear_kernel,
        out_shape=jax.ShapeDtypeStruct((M, d_out), x2d.dtype),
        grid=(pl.cdiv(M, tm),),
        in_specs=[pl.BlockSpec((tm, d_in), lambda i: (i, 0)),
                  pl.BlockSpec((d_in, d_out), lambda i: (0, 0)),
                  pl.BlockSpec((1, d_out), lambda i: (0, 0))],
        out_specs=pl.BlockSpec((tm, d_out), lambda i: (i, 0)),
        compiler_params=_compiler_params(1),
    )(x2d, wt, bias.reshape(1, d_out))


def fc_residual_pl(x2d, wt, bias, residual2d):
    M, d_in = x2d.shape
    d_out = wt.shape[1]
    tm = _row_tile(M)
    return pl.pallas_call(
        _fc_residual_kernel,
        out_shape=jax.ShapeDtypeStruct((M, d_out), residual2d.dtype),
        grid=(pl.cdiv(M, tm),),
        in_specs=[pl.BlockSpec((tm, d_in), lambda i: (i, 0)),
                  pl.BlockSpec((d_in, d_out), lambda i: (0, 0)),
                  pl.BlockSpec((1, d_out), lambda i: (0, 0)),
                  pl.BlockSpec((tm, d_out), lambda i: (i, 0))],
        out_specs=pl.BlockSpec((tm, d_out), lambda i: (i, 0)),
        compiler_params=_compiler_params(1),
    )(x2d, wt, bias.reshape(1, d_out), residual2d)


def attention_pl(qh, kh, vh, temperature, return_attn=True):
    # qh: (B, H, Lq, Dk), kh: (B, H, Lk, Dk), vh: (B, H, Lk, Dv)
    B, H, Lq, Dk = qh.shape
    Lk = kh.shape[2]
    Dv = vh.shape[3]
    in_specs = [pl.BlockSpec((1, H, Lq, Dk), lambda b: (b, 0, 0, 0)),
                pl.BlockSpec((1, H, Lk, Dk), lambda b: (b, 0, 0, 0)),
                pl.BlockSpec((1, H, Lk, Dv), lambda b: (b, 0, 0, 0))]
    out_block = pl.BlockSpec((1, H, Lq, Dv), lambda b: (b, 0, 0, 0))
    if return_attn:
        out, attn = pl.pallas_call(
            functools.partial(_attn_kernel, temperature=temperature),
            out_shape=(jax.ShapeDtypeStruct((B, H, Lq, Dv), qh.dtype),
                       jax.ShapeDtypeStruct((B, H, Lq, Lk), jnp.float32)),
            grid=(B,),
            in_specs=in_specs,
            out_specs=[out_block,
                       pl.BlockSpec((1, H, Lq, Lk), lambda b: (b, 0, 0, 0))],
            compiler_params=_compiler_params(1),
        )(qh, kh, vh)
        return out, attn
    out = pl.pallas_call(
        functools.partial(_attn_kernel_no_probs, temperature=temperature),
        out_shape=jax.ShapeDtypeStruct((B, H, Lq, Dv), qh.dtype),
        grid=(B,),
        in_specs=in_specs,
        out_specs=out_block,
        compiler_params=_compiler_params(1),
    )(qh, kh, vh)
    return out, None


# ---------------------------------------------------------------------------
# MultiHeadAttention forward (glue in plain JAX, hot paths in Pallas)
# ---------------------------------------------------------------------------

def multi_head_attention(params, q, k, v, mask=None, return_attn=True):
    # q, k, v: (B, L, d_model)
    if mask is not None:
        # TODO(synk): masked_fill(-inf) path not wired into the attention kernel.
        raise NotImplementedError("mask is not supported in this synthetic kernel")

    n_head, d_k, d_v = params["n_head"], params["d_k"], params["d_v"]
    sz_b, len_q, d_model = q.shape
    len_k, len_v = k.shape[1], v.shape[1]

    residual = q

    # LayerNorm(q) fused with the q projection; k/v projections (no LN).
    qp = ln_linear_pl(q.reshape(sz_b * len_q, d_model),
                      params["ln_gamma"], params["ln_beta"],
                      params["w_qs_t"], params["b_qs"])
    kp = linear_pl(k.reshape(sz_b * len_k, d_model), params["w_ks_t"], params["b_ks"])
    vp = linear_pl(v.reshape(sz_b * len_v, d_model), params["w_vs_t"], params["b_vs"])

    # view + transpose(1, 2) -> (B, H, L, d)
    qh = qp.reshape(sz_b, len_q, n_head, d_k).transpose(0, 2, 1, 3)
    kh = kp.reshape(sz_b, len_k, n_head, d_k).transpose(0, 2, 1, 3)
    vh = vp.reshape(sz_b, len_v, n_head, d_v).transpose(0, 2, 1, 3)

    # Scaled dot-product attention, all heads of one batch per grid step.
    temperature = float(math.sqrt(d_k))
    out_bh, attn = attention_pl(qh, kh, vh, temperature, return_attn=return_attn)

    # Faithfully reproduce: output.view(n_head, sz_b, len_q, d_v)
    #                       .permute(1, 2, 0, 3).contiguous().view(sz_b, len_q, -1)
    # (raw-buffer reinterpretation of the contiguous (B, H, Lq, Dv) result).
    output = out_bh.reshape(n_head, sz_b, len_q, d_v)
    output = jnp.transpose(output, (1, 2, 0, 3)).reshape(sz_b, len_q, n_head * d_v)

    # fc + (dropout = identity) + residual, fused in one tiled kernel.
    out2d = fc_residual_pl(output.reshape(sz_b * len_q, n_head * d_v),
                           params["w_fc_t"], params["b_fc"],
                           residual.reshape(sz_b * len_q, d_model))
    return out2d.reshape(sz_b, len_q, d_model), attn


def init_params(key, n_head, d_model, d_k, d_v):
    ks = jax.random.split(key, 8)
    std_qk = math.sqrt(2.0 / (d_model + d_k))
    std_v = math.sqrt(2.0 / (d_model + d_v))
    std_fc = math.sqrt(2.0 / (n_head * d_v + d_model))  # xavier_normal_
    # Weights are stored pre-transposed as (d_in, d_out) = W^T once, so kernels run
    # a plain x @ W^T + b MXU matmul with no per-call transpose copy.
    return {
        "n_head": n_head, "d_k": d_k, "d_v": d_v,
        "w_qs_t": std_qk * jax.random.normal(ks[0], (d_model, n_head * d_k), jnp.float32),
        "b_qs": 0.01 * jax.random.normal(ks[1], (n_head * d_k,), jnp.float32),
        "w_ks_t": std_qk * jax.random.normal(ks[2], (d_model, n_head * d_k), jnp.float32),
        "b_ks": 0.01 * jax.random.normal(ks[3], (n_head * d_k,), jnp.float32),
        "w_vs_t": std_v * jax.random.normal(ks[4], (d_model, n_head * d_v), jnp.float32),
        "b_vs": 0.01 * jax.random.normal(ks[5], (n_head * d_v,), jnp.float32),
        "w_fc_t": std_fc * jax.random.normal(ks[6], (n_head * d_v, d_model), jnp.float32),
        "b_fc": 0.01 * jax.random.normal(ks[7], (d_model,), jnp.float32),
        "ln_gamma": jnp.ones((d_model,), jnp.float32),
        "ln_beta": jnp.zeros((d_model,), jnp.float32),
    }


if __name__ == "__main__":
    n_head, d_model, d_k, d_v = 4, 32, 16, 16
    sz_b, seq = 2, 8

    root = jax.random.PRNGKey(0)
    kp, kq, kk, kv = jax.random.split(root, 4)
    params = init_params(kp, n_head, d_model, d_k, d_v)

    q = jax.random.normal(kq, (sz_b, seq, d_model), jnp.float32)
    k = jax.random.normal(kk, (sz_b, seq, d_model), jnp.float32)
    v = jax.random.normal(kv, (sz_b, seq, d_model), jnp.float32)

    out, attn = multi_head_attention(params, q, k, v, mask=None)
    jax.block_until_ready(out)
    jax.block_until_ready(attn)

    assert out.shape == (sz_b, seq, d_model)
    assert attn.shape == (sz_b, n_head, seq, seq)
    print("KERNEL_OK")
</pallas_src>

<mosaic_0001>
module attributes {stable_mosaic.version = 11 : i64} {
  func.func @_ln_linear_kernel(%arg0: i32, %arg1: memref<16x32xf32, #tpu.memory_space<vmem>>, %arg2: memref<1x32xf32, #tpu.memory_space<vmem>>, %arg3: memref<1x32xf32, #tpu.memory_space<vmem>>, %arg4: memref<32x64xf32, #tpu.memory_space<vmem>>, %arg5: memref<1x64xf32, #tpu.memory_space<vmem>>, %arg6: memref<16x64xf32, #tpu.memory_space<vmem>>) attributes {dimension_semantics = [#tpu.dimension_semantics<parallel>], iteration_bounds = array<i64: 1>, scalar_prefetch = 0 : i64, scratch_operands = 0 : i64, tpu.core_type = #tpu.core_type<tc>, window_params = [{transform_indices = @transform_0, window_bounds = array<i64: 16, 32>}, {pipeline_mode = #tpu.pipeline_mode<synchronous>, transform_indices = @transform_1, window_bounds = array<i64: 1, 32>}, {pipeline_mode = #tpu.pipeline_mode<synchronous>, transform_indices = @transform_2, window_bounds = array<i64: 1, 32>}, {pipeline_mode = #tpu.pipeline_mode<synchronous>, transform_indices = @transform_3, window_bounds = array<i64: 32, 64>}, {pipeline_mode = #tpu.pipeline_mode<synchronous>, transform_indices = @transform_4, window_bounds = array<i64: 1, 64>}, {transform_indices = @transform_5, window_bounds = array<i64: 16, 64>}]} {
    %c0 = arith.constant 0 : index
    %c0_0 = arith.constant 0 : index
    %0 = vector.load %arg1[%c0, %c0_0] : memref<16x32xf32, #tpu.memory_space<vmem>>, vector<16x32xf32>
    %cst = arith.constant dense<0.000000e+00> : vector<16xf32>
    %1 = vector.multi_reduction <add>, %0, %cst [1] : vector<16x32xf32> to vector<16xf32>
    %2 = vector.shape_cast %1 : vector<16xf32> to vector<16x1xf32>
    %cst_1 = arith.constant 3.200000e+01 : f32
    %3 = vector.broadcast %cst_1 : f32 to vector<16x1xf32>
    %4 = arith.divf %2, %3 : vector<16x1xf32>
    %5 = vector.broadcast %4 : vector<16x1xf32> to vector<16x32xf32>
    %6 = arith.subf %0, %5 : vector<16x32xf32>
    %7 = arith.mulf %6, %6 : vector<16x32xf32>
    %cst_2 = arith.constant dense<0.000000e+00> : vector<16xf32>
    %8 = vector.multi_reduction <add>, %7, %cst_2 [1] : vector<16x32xf32> to vector<16xf32>
    %9 = vector.shape_cast %8 : vector<16xf32> to vector<16x1xf32>
    %cst_3 = arith.constant 3.200000e+01 : f32
    %10 = vector.broadcast %cst_3 : f32 to vector<16x1xf32>
    %11 = arith.divf %9, %10 : vector<16x1xf32>
    %12 = vector.broadcast %4 : vector<16x1xf32> to vector<16x32xf32>
    %13 = arith.subf %0, %12 : vector<16x32xf32>
    %cst_4 = arith.constant 9.99999974E-6 : f32
    %14 = vector.broadcast %cst_4 : f32 to vector<16x1xf32>
    %15 = arith.addf %11, %14 : vector<16x1xf32>
    %16 = math.rsqrt %15 : vector<16x1xf32>
    %17 = vector.broadcast %16 : vector<16x1xf32> to vector<16x32xf32>
    %18 = arith.mulf %13, %17 : vector<16x32xf32>
    %c0_5 = arith.constant 0 : index
    %c0_6 = arith.constant 0 : index
    %19 = vector.load %arg2[%c0_5, %c0_6] : memref<1x32xf32, #tpu.memory_space<vmem>>, vector<1x32xf32>
    %20 = vector.broadcast %19 : vector<1x32xf32> to vector<16x32xf32>
    %21 = arith.mulf %18, %20 : vector<16x32xf32>
    %c0_7 = arith.constant 0 : index
    %c0_8 = arith.constant 0 : index
    %22 = vector.load %arg3[%c0_7, %c0_8] : memref<1x32xf32, #tpu.memory_space<vmem>>, vector<1x32xf32>
    %23 = vector.broadcast %22 : vector<1x32xf32> to vector<16x32xf32>
    %24 = arith.addf %21, %23 : vector<16x32xf32>
    %c0_9 = arith.constant 0 : index
    %c0_10 = arith.constant 0 : index
    %25 = vector.load %arg4[%c0_9, %c0_10] : memref<32x64xf32, #tpu.memory_space<vmem>>, vector<32x64xf32>
    %cst_11 = arith.constant dense<0.000000e+00> : vector<16x64xf32>
    %26 = tpu.matmul %24, %25, %cst_11 {dimension_numbers = #tpu.dot_dimension_numbers<[1], [0], [0], [1], [0, 0, 1, 1], [], []>} : vector<16x32xf32>, vector<32x64xf32>, vector<16x64xf32> -> vector<16x64xf32>
    %c0_12 = arith.constant 0 : index
    %c0_13 = arith.constant 0 : index
    %27 = vector.load %arg5[%c0_12, %c0_13] : memref<1x64xf32, #tpu.memory_space<vmem>>, vector<1x64xf32>
    %28 = vector.broadcast %27 : vector<1x64xf32> to vector<16x64xf32>
    %29 = arith.addf %26, %28 : vector<16x64xf32>
    %c0_14 = arith.constant 0 : index
    %c0_15 = arith.constant 0 : index
    %30 = vector.load %arg6[%c0_14, %c0_15] : memref<16x64xf32, #tpu.memory_space<vmem>>, vector<16x64xf32>
    tpu.vector_store %arg6[%c0_14, %c0_15], %29 {strides = array<i32>} : memref<16x64xf32, #tpu.memory_space<vmem>>, vector<16x64xf32>,
    return
  }
  func.func @transform_0(%arg0: i32) -> (i32, i32) {
    %c0_i32 = arith.constant 0 : i32
    %c0_i32_0 = arith.constant 0 : i32
    return %arg0, %c0_i32 : i32, i32
  }
  func.func @transform_1(%arg0: i32) -> (i32, i32) {
    %c0_i32 = arith.constant 0 : i32
    %c0_i32_0 = arith.constant 0 : i32
    %c0_i32_1 = arith.constant 0 : i32
    return %c0_i32, %c0_i32_0 : i32, i32
  }
  func.func @transform_2(%arg0: i32) -> (i32, i32) {
    %c0_i32 = arith.constant 0 : i32
    %c0_i32_0 = arith.constant 0 : i32
    %c0_i32_1 = arith.constant 0 : i32
    return %c0_i32, %c0_i32_0 : i32, i32
  }
  func.func @transform_3(%arg0: i32) -> (i32, i32) {
    %c0_i32 = arith.constant 0 : i32
    %c0_i32_0 = arith.constant 0 : i32
    %c0_i32_1 = arith.constant 0 : i32
    return %c0_i32, %c0_i32_0 : i32, i32
  }
  func.func @transform_4(%arg0: i32) -> (i32, i32) {
    %c0_i32 = arith.constant 0 : i32
    %c0_i32_0 = arith.constant 0 : i32
    %c0_i32_1 = arith.constant 0 : i32
    return %c0_i32, %c0_i32_0 : i32, i32
  }
  func.func @transform_5(%arg0: i32) -> (i32, i32) {
    %c0_i32 = arith.constant 0 : i32
    %c0_i32_0 = arith.constant 0 : i32
    return %arg0, %c0_i32 : i32, i32
  }
}

</mosaic_0001>

<llo_original>
// kernel: tpu_custom_call.1
$region0: #{tpu_custom_call.1}
  #allocation0 [shape = 'u32[]', space=smem, size = 0x4, offset = 0x4, fixed_abs, tag = 'smem constant byte address 0x4 - core index']
  #allocation1 [shape = 'u32[144,128]{1,0:T(1,128)}', space=vmem, size = 0x12000, scoped, tag = 'internal scratch']
  %s0 = inlined_call_operand.hbm [shape: f32[16,32], index: 0, kind: input, shape index: {}]
  %s1 = inlined_call_operand.vmem [shape: f32[1,32], index: 1, kind: input, shape index: {}]
  %s2 = inlined_call_operand.vmem [shape: f32[1,32], index: 2, kind: input, shape index: {}]
  %s3 = inlined_call_operand.hbm [shape: f32[32,64], index: 3, kind: input, shape index: {}]
  %s4 = inlined_call_operand.vmem [shape: f32[1,64], index: 4, kind: input, shape index: {}]
  %s5 = inlined_call_operand.hbm [shape: f32[16,64], index: 5, kind: output, shape index: {}]
  %s6 = sld [smem:[#allocation0]]
  $region38: #{tpu_custom_call.1} parent=0
    _
  %s8 = ssub.s32 1, %s6
  %s9 = scalar_select 0, %s8, %s6
  $region1: #{tpu_custom_call.1} parent=0
    #allocation2 [shape = 'u8[8192]{0}', space=vmem, size = 0x2000, scoped, tag = 'input window, operand 0, single buffered']
    #allocation3 [shape = 's32[1]{0}', space=sflag, size = 0x4, scoped, tag = 'scoped memory for tpu_custom_call.1']
    #allocation4 [shape = 's32[1]{0}', space=sflag, size = 0x4, scoped, tag = 'scoped memory for tpu_custom_call.1']
    #allocation5 [shape = 'u8[16384]{0}', space=vmem, size = 0x4000, scoped, tag = 'input window, operand 3, single buffered']
    #allocation6 [shape = 's32[1]{0}', space=sflag, size = 0x4, scoped, tag = 'scoped memory for tpu_custom_call.1']
    #allocation7 [shape = 'u8[8192]{0}', space=vmem, size = 0x2000, scoped, tag = 'output window, operand 0, single buffered']
    %10 = vsyncpa [#allocation3], 0
    %11 = vsyncpa [#allocation6], 0
    %12 = vsyncpa [#allocation4], 0
    // Predicated region
    $region2: #{tpu_custom_call.1} parent=1 // pred_check
      _
    $region3: #{tpu_custom_call.1} parent=1 // pred_check_branch
      %14 = sbr.rel (0) target = $region5
    $region4: #{tpu_custom_call.1} parent=1 // pred_region
      %s16 = ssub.s32 256, 256
      %17 = vsyncadd [#allocation3], %s16
      %s18 = sshll.u32 [#allocation2], 4
      %s19 = int_to_ptr.vmem [resolvable:$true] %s18
      %24 = dma.hbm_to_vmem [thread:$0]  %s0, 256, %s19, [#allocation3], 128, 128, 8
    $region5: #{tpu_custom_call.1} parent=1 // pred_fallthru
      _
    // Predicated region
    $region6: #{tpu_custom_call.1} parent=1 // pred_check
      _
    $region7: #{tpu_custom_call.1} parent=1 // pred_check_branch
      %26 = sbr.rel (0) target = $region9
    $region8: #{tpu_custom_call.1} parent=1 // pred_region
      _
    $region9: #{tpu_custom_call.1} parent=1 // pred_fallthru
      _
    // Predicated region
    $region10: #{tpu_custom_call.1} parent=1 // pred_check
      _
    $region11: #{tpu_custom_call.1} parent=1 // pred_check_branch
      %28 = sbr.rel (0) target = $region13
    $region12: #{tpu_custom_call.1} parent=1 // pred_region
      _
    $region13: #{tpu_custom_call.1} parent=1 // pred_fallthru
      _
    // Predicated region
    $region14: #{tpu_custom_call.1} parent=1 // pred_check
      _
    $region15: #{tpu_custom_call.1} parent=1 // pred_check_branch
      %30 = sbr.rel (0) target = $region17
    $region16: #{tpu_custom_call.1} parent=1 // pred_region
      %s32 = ssub.s32 512, 512
      %33 = vsyncadd [#allocation6], %s32
      %s34 = sshll.u32 [#allocation5], 4
      %s35 = int_to_ptr.vmem [resolvable:$true] %s34
      %40 = dma.hbm_to_vmem [thread:$0]  %s3, 512, %s35, [#allocation6], 128, 128, 8
    $region17: #{tpu_custom_call.1} parent=1 // pred_fallthru
      _
    // Predicated region
    $region18: #{tpu_custom_call.1} parent=1 // pred_check
      _
    $region19: #{tpu_custom_call.1} parent=1 // pred_check_branch
      %42 = sbr.rel (0) target = $region21
    $region20: #{tpu_custom_call.1} parent=1 // pred_region
      _
    $region21: #{tpu_custom_call.1} parent=1 // pred_fallthru
      _
    // Predicated region
    $region22: #{tpu_custom_call.1} parent=1 // pred_check
      _
    $region23: #{tpu_custom_call.1} parent=1 // pred_check_branch
      %44 = sbr.rel (0) target = $region25
    $region24: #{tpu_custom_call.1} parent=1 // pred_region
      %45 = dma.done [#allocation3], 256
    $region25: #{tpu_custom_call.1} parent=1 // pred_fallthru
      _
    // Predicated region
    $region26: #{tpu_custom_call.1} parent=1 // pred_check
      _
    $region27: #{tpu_custom_call.1} parent=1 // pred_check_branch
      %47 = sbr.rel (0) target = $region29
    $region28: #{tpu_custom_call.1} parent=1 // pred_region
      %48 = dma.done [#allocation6], 512
    $region29: #{tpu_custom_call.1} parent=1 // pred_fallthru
      _
    %v49 = vld [vmem:[#allocation2] sm:$0xff]
    %v50 = vld [vmem:[#allocation2 + $0x8] sm:$0xff]
    %vm51 = vcmask 261120
    %v52 = vsel %vm51, %v49, 0.0
    %53 = vadd.xlane.f32.xlu0 %v52
    %v54 = vpop.xlane.xlu0 %53
    %v55 = vsel %vm51, %v50, 0.0
    %56 = vadd.xlane.f32.xlu0 %v55
    %v57 = vpop.xlane.xlu0 %56
    %v58 = vrcp.pop 32.0
    %v59 = vmul.f32 %v54, %v58
    %v60 = vmul.f32 %v57, %v58
    %v61 = vsub.f32 %v49, %v59
    %v62 = vsub.f32 %v50, %v60
    %v63 = vmul.f32 %v61, %v61
    %v64 = vmul.f32 %v62, %v62
    %v65 = vsel %vm51, %v63, 0.0
    %66 = vadd.xlane.f32.xlu0 %v65
    %v67 = vpop.xlane.xlu0 %66
    %v68 = vsel %vm51, %v64, 0.0
    %69 = vadd.xlane.f32.xlu0 %v68
    %v70 = vpop.xlane.xlu0 %69
    %v71 = vmul.f32 %v67, %v58
    %v72 = vmul.f32 %v70, %v58
    %v73 = vadd.f32 %v71, 1e-05
    %v74 = vadd.f32 %v72, 1e-05
    %v75 = vrsqrt.pop %v73
    %v76 = vrsqrt.pop %v74
    %v77 = vmul.f32 %v61, %v75
    %v78 = vmul.f32 %v62, %v76
    %v79 = vld [vmem:[%s1] sm:$0x1]
    %v81 = vlaneseq
    %v82 = vshrl.u32 %v81, 7
    %v83 = vsub.s32 0, %v82
    %v84 = vrot.slane %v79, %v83
    %v86 = vmul.f32 %v77, %v84
    %v87 = vmul.f32 %v78, %v84
    %v88 = vld [vmem:[%s2] sm:$0x1]
    %v90 = vlaneseq
    %v91 = vshrl.u32 %v90, 7
    %v92 = vsub.s32 0, %v91
    %v93 = vrot.slane %v88, %v92
    %v95 = vadd.f32 %v86, %v93
    %v96 = vadd.f32 %v87, %v93
    %v97 = vld [vmem:[#allocation5] sm:$0xff]
    %v98 = vld [vmem:[#allocation5 + $0x8] sm:$0xff]
    %v99 = vld [vmem:[#allocation5 + $0x10] sm:$0xff]
    %v100 = vld [vmem:[#allocation5 + $0x18] sm:$0xff]
    %v101 = vld [vmem:[%s4] sm:$0x1]
    %v103 = vlaneseq
    %v104 = vshrl.u32 %v103, 7
    %v105 = vsub.s32 0, %v104
    %v106 = vrot.slane %v101, %v105
    %v109 = vsel %vm51, %v95, 0
    %v112 = vsel %vm51, %v96, 0
    %114 = vmatprep.subr.mxu0 0.0
    %115 = vmatpush1.msra.mxu0 0.0
    %116 = vmatprep.subr.mxu0 0.0
    %117 = vmatpush1.msra.mxu0 0.0
    %118 = vmatprep.subr.mxu0 0.0
    %119 = vmatpush1.msra.mxu0 0.0
    %120 = vmatprep.subr.mxu0 0.0
    %121 = vmatpush1.msra.mxu0 0.0
    %122 = vmatprep.subr.mxu0 0.0
    %123 = vmatpush1.msra.mxu0 0.0
    %124 = vmatprep.subr.mxu0 0.0
    %125 = vmatpush1.msra.mxu0 0.0
    %126 = vmatprep.subr.mxu0 0.0
    %127 = vmatpush1.msra.mxu0 0.0
    %128 = vmatprep.subr.mxu0 0.0
    %129 = vmatpush1.msra.mxu0 0.0
    %130 = vmatprep.subr.mxu0 0.0
    %131 = vmatpush1.msra.mxu0 0.0
    %132 = vmatprep.subr.mxu0 0.0
    %133 = vmatpush1.msra.mxu0 0.0
    %134 = vmatprep.subr.mxu0 0.0
    %135 = vmatpush1.msra.mxu0 0.0
    %136 = vmatprep.subr.mxu0 0.0
    %137 = vmatpush1.msra.mxu0 0.0
    %138 = vmatprep.subr.mxu0 0.0
    %139 = vmatpush1.msra.mxu0 %v100
    %140 = vmatprep.subr.mxu0 0.0
    %141 = vmatpush1.msra.mxu0 %v99
    %142 = vmatprep.subr.mxu0 0.0
    %143 = vmatpush1.msra.mxu0 %v98
    %144 = vmatprep.subr.mxu0 0.0
    %145 = vmatpush1.msra.mxu0 %v97
    %146 = vmatprep.subr.mxu0 0.0
    %147 = vmatpush2.msra.mxu0 0.0
    %148 = vmatprep.subr.mxu0 0.0
    %149 = vmatpush2.msra.mxu0 0.0
    %150 = vmatprep.subr.mxu0 0.0
    %151 = vmatpush2.msra.mxu0 0.0
    %152 = vmatprep.subr.mxu0 0.0
    %153 = vmatpush2.msra.mxu0 0.0
    %154 = vmatprep.subr.mxu0 0.0
    %155 = vmatpush2.msra.mxu0 0.0
    %156 = vmatprep.subr.mxu0 0.0
    %157 = vmatpush2.msra.mxu0 0.0
    %158 = vmatprep.subr.mxu0 0.0
    %159 = vmatpush2.msra.mxu0 0.0
    %160 = vmatprep.subr.mxu0 0.0
    %161 = vmatpush2.msra.mxu0 0.0
    %162 = vmatprep.subr.mxu0 0.0
    %163 = vmatpush2.msra.mxu0 0.0
    %164 = vmatprep.subr.mxu0 0.0
    %165 = vmatpush2.msra.mxu0 0.0
    %166 = vmatprep.subr.mxu0 0.0
    %167 = vmatpush2.msra.mxu0 0.0
    %168 = vmatprep.subr.mxu0 0.0
    %169 = vmatpush2.msra.mxu0 0.0
    %170 = vmatprep.subr.mxu0 0.0
    %171 = vmatpush2.msra.mxu0 0.0
    %172 = vmatprep.subr.mxu0 0.0
    %173 = vmatpush2.msra.mxu0 0.0
    %174 = vmatprep.subr.mxu0 0.0
    %175 = vmatpush2.msra.mxu0 0.0
    %176 = vmatprep.subr.mxu0 0.0
    %177 = vmatpush2.msra.mxu0 0.0
    %178 = vmatprep.mubr.f32.mxu0 0.0
    %179 = vmatmul.mubr.f32.gmra.mxu0 %v109
    %v180 = vpop.f32.mrf.mxu0
    %v181 = vadd.f32 %v106, %v180
    %v182 = vpop.f32.mrf.mxu0
    %183 = vmatprep.mubr.f32.mxu0 0.0
    %184 = vmatmul.mubr.f32.gmra.mxu0 %v112
    %v185 = vpop.f32.mrf.mxu0
    %v186 = vadd.f32 %v106, %v185
    %v187 = vpop.f32.mrf.mxu0
    %188 = vdwg.mxu0
    %vm189 = vcmask 523264
    %190 = vst.msk [vmem:[#allocation7] sm:$0xff] %vm189, %v181
    %191 = vst.msk [vmem:[#allocation7 + $0x8] sm:$0xff] %vm189, %v186
    // Predicated region
    $region30: #{tpu_custom_call.1} parent=1 // pred_check
      _
    $region31: #{tpu_custom_call.1} parent=1 // pred_check_branch
      %193 = sbr.rel (0) target = $region33
    $region32: #{tpu_custom_call.1} parent=1 // pred_region
      %s195 = ssub.s32 256, 256
      %196 = vsyncadd [#allocation4], %s195
      %s197 = sshll.u32 [#allocation7], 4
      %s198 = int_to_ptr.vmem [resolvable:$true] %s197
      %203 = dma.vmem_to_hbm [thread:$0]  %s198, 256, %s5, [#allocation4], 128, 128, 8
    $region33: #{tpu_custom_call.1} parent=1 // pred_fallthru
      _
    // Predicated region
    $region34: #{tpu_custom_call.1} parent=1 // pred_check
      _
    $region35: #{tpu_custom_call.1} parent=1 // pred_check_branch
      %205 = sbr.rel (0) target = $region37
    $region36: #{tpu_custom_call.1} parent=1 // pred_region
      %206 = dma.done [#allocation4], 256
    $region37: #{tpu_custom_call.1} parent=1 // pred_fallthru
      _
    %207 = vsyncpa [#allocation3], 1
    %208 = vsyncpa [#allocation6], 1
    %209 = vsyncpa [#allocation4], 1

</llo_original>
